<compile_context>
chip_gen: v5e
topology: v5e:2x2
jax: 0.10.0
libtpu: 0.0.40
codegen_flags: <defaults>
</compile_context>

<pallas_src>
import jax
import jax.numpy as jnp
from jax.experimental import pallas as pl
from jax.experimental.pallas import tpu as pltpu


def _pick_batch_tile(bs):
    """Largest Bt <= 8 dividing bs while keeping >= 2 grid steps (v7x: keep
    both TensorCores busy via the parallel batch axis)."""
    if bs == 1:
        return 1
    for bt in (8, 4, 2, 1):
        if bs % bt == 0 and bs // bt >= 2:
            return bt
    return 1


def _make_gat_kernel(n_head, f_out, bt, n, adj_is_int8):
    hf = n_head * f_out
    bn = bt * n

    def kernel(h_ref, w_ref, a_ref, smat_ref, vt_ref, adj_ref, bias_ref,
               out_ref):
        # ---- Fused over the whole batch tile (M = Bt*n for the MXU) ----
        f_in = h_ref.shape[-1]
        n_types = vt_ref.shape[-1]

        h_flat = h_ref[...].reshape(bn, f_in)              # bf16 already
        hp = jnp.dot(h_flat, w_ref[...],
                     preferred_element_type=jnp.float32)   # (Bt*n, H*F) f32
        t = jnp.tanh(hp)                                   # EUP
        hp_bf = hp.astype(jnp.bfloat16)                    # only bf16 hp stays live

        # Type gating, lane dense: (Bt*n, 2*H*F) = [gated_src | gated_dst].
        vt_flat = vt_ref[...].reshape(bn, n_types)
        gated = jnp.dot(vt_flat, a_ref[...],
                        preferred_element_type=jnp.float32)

        # Merged per-head row sums: one MXU push instead of two.
        tg = jnp.concatenate([t * gated[:, :hf], t * gated[:, hf:]], axis=0)
        sd = jnp.dot(tg, smat_ref[...],
                     preferred_element_type=jnp.float32)   # (2*Bt*n, H)
        s_all = sd[:bn]                                    # attn_src, (Bt*n, H)
        d_all = sd[bn:]                                    # attn_dst, (Bt*n, H)

        bias_row = bias_ref[...]                           # (1, f_out) f32

        for bi in range(bt):                               # static, unrolled
            # Hoisted additive adjacency mask for this batch (all heads share).
            if adj_is_int8:
                mask_add = jnp.where(adj_ref[bi] > 0, 0.0, -1e30)
            else:
                mask_add = adj_ref[bi]                     # already 0 / -1e30 f32

            s_b = s_all[bi * n:(bi + 1) * n, :]            # (n, H)
            d_t = d_all[bi * n:(bi + 1) * n, :].T          # (H, n): tiny XLU transpose/batch
            hp_b = hp_bf[bi * n:(bi + 1) * n, :]           # (n, H*F) bf16

            for hd in range(n_head):                       # static, unrolled
                # Outer sum: one lane-broadcast (column) + sublane-broadcast row.
                logits = s_b[:, hd:hd + 1] + d_t[hd:hd + 1, :]        # (n, n)
                logits = jnp.where(logits >= 0, logits, 0.2 * logits)  # LeakyReLU
                logits = logits + mask_add                            # hoisted mask
                m = jnp.max(logits, axis=-1, keepdims=True)
                e = jnp.exp(logits - m)
                p = e * pl.reciprocal(jnp.sum(e, axis=-1, keepdims=True),
                                      approx=True)
                res = jnp.dot(p.astype(jnp.bfloat16),
                              hp_b[:, hd * f_out:(hd + 1) * f_out],
                              preferred_element_type=jnp.float32)
                # Direct per-head lane-slice store; no concatenate, bias folded.
                out_ref[bi, :, hd * f_out:(hd + 1) * f_out] = res + bias_row

    return kernel


def batch_multi_head_graph_attention(h, adj, v_types, w, a_src, a_dst, bias):
    bs, n, f_in = h.shape
    n_head, _, f_out = w.shape
    n_types = a_src.shape[-1]
    hf = n_head * f_out

    bt = _pick_batch_tile(bs)
    grid = bs // bt

    # Pack weights head-major along the lane axis.
    w_packed = jnp.transpose(w, (1, 0, 2)).reshape(f_in, hf).astype(jnp.bfloat16)
    a_src_p = jnp.transpose(a_src, (2, 0, 1)).reshape(n_types, hf)
    a_dst_p = jnp.transpose(a_dst, (2, 0, 1)).reshape(n_types, hf)
    a_packed = jnp.concatenate([a_src_p, a_dst_p], axis=1)        # (T, 2*H*F)

    # Block indicator summing each head's f_out slice: (H*F, H).
    smat = (jnp.arange(hf)[:, None] // f_out
            == jnp.arange(n_head)[None, :]).astype(jnp.float32)

    bias_row = bias.reshape(1, f_out).astype(jnp.float32)

    # bf16 activations to the MXU: cast in the wrapper (halves h DMA bytes).
    h_bf = h.astype(jnp.bfloat16)

    # Small n: ship the f32 additive mask (no int8 unpack, padding voids the
    # int8 saving anyway).  Large n: int8 adjacency, mask built once in-kernel.
    adj_is_int8 = n >= 256
    if adj_is_int8:
        adj_in = (adj != 0).astype(jnp.int8)
        adj_bytes = 1
    else:
        adj_in = jnp.where(adj > 0, jnp.float32(0.0), jnp.float32(-1e30))
        adj_bytes = 4

    cost = pl.CostEstimate(
        flops=int(bs * (2 * n * f_in * hf                 # h @ W
                        + 2 * n * n_types * 2 * hf        # vt @ A
                        + 2 * 2 * n * hf * n_head         # merged row-sum matmul
                        + n_head * 2 * n * n * f_out      # p @ h_prime
                        + 8 * n_head * n * n)),           # softmax elementwise
        transcendentals=int(bs * (n * hf + n_head * n * n)),
        bytes_accessed=int(bs * (n * f_in * 2 + n * n_types * 4
                                 + n * n * adj_bytes + n * hf * 4)
                           + 2 * f_in * hf
                           + 4 * (n_types * 2 * hf + hf * n_head + f_out)),
    )

    # Explicit VMEM budget (double-buffered inputs + output + intermediates),
    # clamped to 64 MiB so it is legal on v7x as well as v5e/v6e.
    in_bytes = (bt * n * f_in * 2 + f_in * hf * 2 + n_types * 2 * hf * 4
                + hf * n_head * 4 + bt * n * n_types * 4
                + bt * n * n * adj_bytes + f_out * 4)
    out_bytes = bt * n * hf * 4
    interm = 6 * bt * n * hf * 4 + 8 * n * n * 4
    vmem_limit = int(min(64 * 1024 * 1024,
                         max(32 * 1024 * 1024, 2 * (2 * (in_bytes + out_bytes)
                                                    + interm))))

    out_packed = pl.pallas_call(
        _make_gat_kernel(n_head, f_out, bt, n, adj_is_int8),
        out_shape=jax.ShapeDtypeStruct((bs, n, hf), jnp.float32),
        grid_spec=pltpu.PrefetchScalarGridSpec(
            num_scalar_prefetch=0,
            grid=(grid,),
            in_specs=[
                pl.BlockSpec((bt, n, f_in), lambda b: (b, 0, 0)),      # h (bf16)
                pl.BlockSpec((f_in, hf), lambda b: (0, 0)),            # w_packed
                pl.BlockSpec((n_types, 2 * hf), lambda b: (0, 0)),     # a_packed
                pl.BlockSpec((hf, n_head), lambda b: (0, 0)),          # smat
                pl.BlockSpec((bt, n, n_types), lambda b: (b, 0, 0)),   # v_types
                pl.BlockSpec((bt, n, n), lambda b: (b, 0, 0)),         # adj/mask
                pl.BlockSpec((1, f_out), lambda b: (0, 0)),            # bias
            ],
            out_specs=pl.BlockSpec((bt, n, hf), lambda b: (b, 0, 0)),
        ),
        compiler_params=pltpu.CompilerParams(
            dimension_semantics=("parallel",),
            vmem_limit_bytes=vmem_limit),
        cost_estimate=cost,
    )(h_bf, w_packed, a_packed, smat, v_types, adj_in, bias_row)

    # Layout plumbing back to the module's (bs, n_head, n, f_out) output.
    return out_packed.reshape(bs, n, n_head, f_out).transpose(0, 2, 1, 3)


def _reference(h, adj, v_types, w, a_src, a_dst, bias):
    # Pure-JAX f32 reference mirroring the PyTorch forward.
    h_prime = jnp.einsum("bnf,hfo->bhno", h, w)                    # (bs,H,n,F)
    t = jnp.tanh(h_prime)
    vt = v_types[:, None, :, :]                                    # (bs,1,n,T)
    attn_src = jnp.sum(jnp.einsum("bhno,hot->bhnt", t, a_src) * vt,
                       axis=3, keepdims=True)
    attn_dst = jnp.sum(jnp.einsum("bhno,hot->bhnt", t, a_dst) * vt,
                       axis=3, keepdims=True)
    attn = attn_src + jnp.swapaxes(attn_dst, 2, 3)
    attn = jnp.where(attn >= 0, attn, 0.2 * attn)
    attn = jnp.where(adj[:, None, :, :] > 0, attn, -jnp.inf)
    attn = jax.nn.softmax(attn, axis=-1)
    out = jnp.einsum("bhij,bhjo->bhio", attn, h_prime)
    return out + bias[0]


if __name__ == "__main__":
    bs, n, f_in, f_out = 2, 16, 32, 32
    n_head, n_types = 4, 4

    key = jax.random.PRNGKey(0)
    k_h, k_w, k_as, k_ad, k_adj, k_vt = jax.random.split(key, 6)

    def xavier(k, shape, fan_in, fan_out):
        bound = (6.0 / (fan_in + fan_out)) ** 0.5
        return jax.random.uniform(k, shape, jnp.float32, -bound, bound)

    w = xavier(k_w, (n_head, f_in, f_out), n_head * f_in, f_out)
    a_src = xavier(k_as, (n_head, f_out, n_types), n_head * f_out, n_types)
    a_dst = xavier(k_ad, (n_head, f_out, n_types), n_head * f_out, n_types)
    bias = jnp.zeros((1, f_out), jnp.float32)

    h = jax.random.normal(k_h, (bs, n, f_in), jnp.float32)

    # Random adjacency with self loops (avoids fully-masked rows; see note).
    adj = (jax.random.uniform(k_adj, (bs, n, n)) > 0.5).astype(jnp.float32)
    adj = jnp.maximum(adj, jnp.eye(n, dtype=jnp.float32)[None, :, :])

    # One-hot node types.
    types = jax.random.randint(k_vt, (bs, n), 0, n_types)
    v_types = jax.nn.one_hot(types, n_types, dtype=jnp.float32)

    out = batch_multi_head_graph_attention(h, adj, v_types, w, a_src, a_dst,
                                           bias)
    out = jax.block_until_ready(out)

    ref = _reference(h, adj, v_types, w, a_src, a_dst, bias)
    assert out.shape == (bs, n_head, n, f_out)
    # bf16 MXU operands + approx reciprocal -> slightly relaxed tolerance.
    assert jnp.allclose(out, ref, atol=5e-2, rtol=5e-2)

    print("KERNEL_OK")
</pallas_src>

<mosaic_0001>
module attributes {stable_mosaic.version = 11 : i64} {
  func.func @kernel(%arg0: i32, %arg1: memref<1x16x32xbf16, #tpu.memory_space<vmem>>, %arg2: memref<32x128xbf16, #tpu.memory_space<vmem>>, %arg3: memref<4x256xf32, #tpu.memory_space<vmem>>, %arg4: memref<128x4xf32, #tpu.memory_space<vmem>>, %arg5: memref<1x16x4xf32, #tpu.memory_space<vmem>>, %arg6: memref<1x16x16xf32, #tpu.memory_space<vmem>>, %arg7: memref<1x32xf32, #tpu.memory_space<vmem>>, %arg8: memref<1x16x128xf32, #tpu.memory_space<vmem>>) attributes {dimension_semantics = [#tpu.dimension_semantics<parallel>], iteration_bounds = array<i64: 2>, scalar_prefetch = 0 : i64, scratch_operands = 0 : i64, tpu.core_type = #tpu.core_type<tc>, window_params = [{transform_indices = @transform_0, window_bounds = array<i64: 1, 16, 32>}, {pipeline_mode = #tpu.pipeline_mode<synchronous>, transform_indices = @transform_1, window_bounds = array<i64: 32, 128>}, {pipeline_mode = #tpu.pipeline_mode<synchronous>, transform_indices = @transform_2, window_bounds = array<i64: 4, 256>}, {pipeline_mode = #tpu.pipeline_mode<synchronous>, transform_indices = @transform_3, window_bounds = array<i64: 128, 4>}, {transform_indices = @transform_4, window_bounds = array<i64: 1, 16, 4>}, {transform_indices = @transform_5, window_bounds = array<i64: 1, 16, 16>}, {pipeline_mode = #tpu.pipeline_mode<synchronous>, transform_indices = @transform_6, window_bounds = array<i64: 1, 32>}, {transform_indices = @transform_7, window_bounds = array<i64: 1, 16, 128>}]} {
    %c0 = arith.constant 0 : index
    %c0_0 = arith.constant 0 : index
    %c0_1 = arith.constant 0 : index
    %0 = vector.load %arg1[%c0, %c0_0, %c0_1] : memref<1x16x32xbf16, #tpu.memory_space<vmem>>, vector<1x16x32xbf16>
    %1 = vector.shape_cast %0 : vector<1x16x32xbf16> to vector<16x32xbf16>
    %c0_2 = arith.constant 0 : index
    %c0_3 = arith.constant 0 : index
    %2 = vector.load %arg2[%c0_2, %c0_3] : memref<32x128xbf16, #tpu.memory_space<vmem>>, vector<32x128xbf16>
    %cst = arith.constant dense<0.000000e+00> : vector<16x128xf32>
    %3 = tpu.matmul %1, %2, %cst {dimension_numbers = #tpu.dot_dimension_numbers<[1], [0], [0], [1], [0, 0, 1, 1], [], []>} : vector<16x32xbf16>, vector<32x128xbf16>, vector<16x128xf32> -> vector<16x128xf32>
    %4 = math.tanh %3 : vector<16x128xf32>
    %5 = arith.truncf %3 : vector<16x128xf32> to vector<16x128xbf16>
    %c0_4 = arith.constant 0 : index
    %c0_5 = arith.constant 0 : index
    %c0_6 = arith.constant 0 : index
    %6 = vector.load %arg5[%c0_4, %c0_5, %c0_6] : memref<1x16x4xf32, #tpu.memory_space<vmem>>, vector<1x16x4xf32>
    %7 = vector.shape_cast %6 : vector<1x16x4xf32> to vector<16x4xf32>
    %c0_7 = arith.constant 0 : index
    %c0_8 = arith.constant 0 : index
    %8 = vector.load %arg3[%c0_7, %c0_8] : memref<4x256xf32, #tpu.memory_space<vmem>>, vector<4x256xf32>
    %cst_9 = arith.constant dense<0.000000e+00> : vector<16x256xf32>
    %9 = tpu.matmul %7, %8, %cst_9 {dimension_numbers = #tpu.dot_dimension_numbers<[1], [0], [0], [1], [0, 0, 1, 1], [], []>} : vector<16x4xf32>, vector<4x256xf32>, vector<16x256xf32> -> vector<16x256xf32>
    %10 = vector.extract_strided_slice %9 {offsets = [0, 0], sizes = [16, 128], strides = [1, 1]} : vector<16x256xf32> to vector<16x128xf32>
    %11 = arith.mulf %4, %10 : vector<16x128xf32>
    %12 = vector.extract_strided_slice %9 {offsets = [0, 128], sizes = [16, 128], strides = [1, 1]} : vector<16x256xf32> to vector<16x128xf32>
    %13 = arith.mulf %4, %12 : vector<16x128xf32>
    %14 = tpu.concatenate %11, %13 in 0 : vector<16x128xf32>, vector<16x128xf32> -> vector<32x128xf32>
    %c0_10 = arith.constant 0 : index
    %c0_11 = arith.constant 0 : index
    %15 = vector.load %arg4[%c0_10, %c0_11] : memref<128x4xf32, #tpu.memory_space<vmem>>, vector<128x4xf32>
    %cst_12 = arith.constant dense<0.000000e+00> : vector<32x4xf32>
    %16 = tpu.matmul %14, %15, %cst_12 {dimension_numbers = #tpu.dot_dimension_numbers<[1], [0], [0], [1], [0, 0, 1, 1], [], []>} : vector<32x128xf32>, vector<128x4xf32>, vector<32x4xf32> -> vector<32x4xf32>
    %17 = vector.extract_strided_slice %16 {offsets = [0, 0], sizes = [16, 4], strides = [1, 1]} : vector<32x4xf32> to vector<16x4xf32>
    %18 = vector.extract_strided_slice %16 {offsets = [16, 0], sizes = [16, 4], strides = [1, 1]} : vector<32x4xf32> to vector<16x4xf32>
    %c0_13 = arith.constant 0 : index
    %c0_14 = arith.constant 0 : index
    %19 = vector.load %arg7[%c0_13, %c0_14] : memref<1x32xf32, #tpu.memory_space<vmem>>, vector<1x32xf32>
    %c0_15 = arith.constant 0 : index
    %c0_16 = arith.constant 0 : index
    %c0_17 = arith.constant 0 : index
    %20 = vector.load %arg6[%c0_15, %c0_16, %c0_17] : memref<1x16x16xf32, #tpu.memory_space<vmem>>, vector<1x16x16xf32>
    %21 = vector.shape_cast %20 : vector<1x16x16xf32> to vector<16x16xf32>
    %22 = tpu.transpose %18, [1, 0] : vector<16x4xf32> -> vector<4x16xf32>
    %23 = vector.extract_strided_slice %17 {offsets = [0, 0], sizes = [16, 1], strides = [1, 1]} : vector<16x4xf32> to vector<16x1xf32>
    %24 = vector.extract_strided_slice %22 {offsets = [0, 0], sizes = [1, 16], strides = [1, 1]} : vector<4x16xf32> to vector<1x16xf32>
    %25 = vector.broadcast %23 : vector<16x1xf32> to vector<16x16xf32>
    %26 = vector.broadcast %24 : vector<1x16xf32> to vector<16x16xf32>
    %27 = arith.addf %25, %26 : vector<16x16xf32>
    %cst_18 = arith.constant 0.000000e+00 : f32
    %28 = vector.broadcast %cst_18 : f32 to vector<16x16xf32>
    %29 = arith.cmpf oge, %27, %28 : vector<16x16xf32>
    %cst_19 = arith.constant 2.000000e-01 : f32
    %30 = vector.broadcast %cst_19 : f32 to vector<16x16xf32>
    %31 = arith.mulf %30, %27 : vector<16x16xf32>
    %32 = arith.select %29, %27, %31 : vector<16x16xi1>, vector<16x16xf32>
    %33 = arith.addf %32, %21 : vector<16x16xf32>
    %cst_20 = arith.constant dense<0xFF800000> : vector<16xf32>
    %34 = vector.multi_reduction <maximumf>, %33, %cst_20 [1] : vector<16x16xf32> to vector<16xf32>
    %35 = vector.shape_cast %34 : vector<16xf32> to vector<16x1xf32>
    %36 = vector.broadcast %35 : vector<16x1xf32> to vector<16x16xf32>
    %37 = arith.subf %33, %36 : vector<16x16xf32>
    %38 = math.exp %37 : vector<16x16xf32>
    %cst_21 = arith.constant dense<0.000000e+00> : vector<16xf32>
    %39 = vector.multi_reduction <add>, %38, %cst_21 [1] : vector<16x16xf32> to vector<16xf32>
    %40 = vector.shape_cast %39 : vector<16xf32> to vector<16x1xf32>
    %41 = tpu.reciprocal %40 {approx = true} : vector<16x1xf32> -> vector<16x1xf32>
    %42 = vector.broadcast %41 : vector<16x1xf32> to vector<16x16xf32>
    %43 = arith.mulf %38, %42 : vector<16x16xf32>
    %44 = arith.truncf %43 : vector<16x16xf32> to vector<16x16xbf16>
    %45 = vector.extract_strided_slice %5 {offsets = [0, 0], sizes = [16, 32], strides = [1, 1]} : vector<16x128xbf16> to vector<16x32xbf16>
    %cst_22 = arith.constant dense<0.000000e+00> : vector<16x32xf32>
    %46 = tpu.matmul %44, %45, %cst_22 {dimension_numbers = #tpu.dot_dimension_numbers<[1], [0], [0], [1], [0, 0, 1, 1], [], []>} : vector<16x16xbf16>, vector<16x32xbf16>, vector<16x32xf32> -> vector<16x32xf32>
    %47 = vector.broadcast %19 : vector<1x32xf32> to vector<16x32xf32>
    %48 = arith.addf %46, %47 : vector<16x32xf32>
    %c0_23 = arith.constant 0 : index
    %c0_24 = arith.constant 0 : index
    %c0_25 = arith.constant 0 : index
    %49 = vector.load %arg8[%c0_23, %c0_24, %c0_25] : memref<1x16x128xf32, #tpu.memory_space<vmem>>, vector<1x16x32xf32>
    %50 = vector.shape_cast %49 : vector<1x16x32xf32> to vector<16x32xf32>
    %51 = vector.shape_cast %48 : vector<16x32xf32> to vector<1x16x32xf32>
    tpu.vector_store %arg8[%c0_23, %c0_24, %c0_25], %51 {strides = array<i32>} : memref<1x16x128xf32, #tpu.memory_space<vmem>>, vector<1x16x32xf32>,
    %52 = vector.extract_strided_slice %17 {offsets = [0, 1], sizes = [16, 1], strides = [1, 1]} : vector<16x4xf32> to vector<16x1xf32>
    %53 = vector.extract_strided_slice %22 {offsets = [1, 0], sizes = [1, 16], strides = [1, 1]} : vector<4x16xf32> to vector<1x16xf32>
    %54 = vector.broadcast %52 : vector<16x1xf32> to vector<16x16xf32>
    %55 = vector.broadcast %53 : vector<1x16xf32> to vector<16x16xf32>
    %56 = arith.addf %54, %55 : vector<16x16xf32>
    %cst_26 = arith.constant 0.000000e+00 : f32
    %57 = vector.broadcast %cst_26 : f32 to vector<16x16xf32>
    %58 = arith.cmpf oge, %56, %57 : vector<16x16xf32>
    %cst_27 = arith.constant 2.000000e-01 : f32
    %59 = vector.broadcast %cst_27 : f32 to vector<16x16xf32>
    %60 = arith.mulf %59, %56 : vector<16x16xf32>
    %61 = arith.select %58, %56, %60 : vector<16x16xi1>, vector<16x16xf32>
    %62 = arith.addf %61, %21 : vector<16x16xf32>
    %cst_28 = arith.constant dense<0xFF800000> : vector<16xf32>
    %63 = vector.multi_reduction <maximumf>, %62, %cst_28 [1] : vector<16x16xf32> to vector<16xf32>
    %64 = vector.shape_cast %63 : vector<16xf32> to vector<16x1xf32>
    %65 = vector.broadcast %64 : vector<16x1xf32> to vector<16x16xf32>
    %66 = arith.subf %62, %65 : vector<16x16xf32>
    %67 = math.exp %66 : vector<16x16xf32>
    %cst_29 = arith.constant dense<0.000000e+00> : vector<16xf32>
    %68 = vector.multi_reduction <add>, %67, %cst_29 [1] : vector<16x16xf32> to vector<16xf32>
    %69 = vector.shape_cast %68 : vector<16xf32> to vector<16x1xf32>
    %70 = tpu.reciprocal %69 {approx = true} : vector<16x1xf32> -> vector<16x1xf32>
    %71 = vector.broadcast %70 : vector<16x1xf32> to vector<16x16xf32>
    %72 = arith.mulf %67, %71 : vector<16x16xf32>
    %73 = arith.truncf %72 : vector<16x16xf32> to vector<16x16xbf16>
    %74 = vector.extract_strided_slice %5 {offsets = [0, 32], sizes = [16, 32], strides = [1, 1]} : vector<16x128xbf16> to vector<16x32xbf16>
    %cst_30 = arith.constant dense<0.000000e+00> : vector<16x32xf32>
    %75 = tpu.matmul %73, %74, %cst_30 {dimension_numbers = #tpu.dot_dimension_numbers<[1], [0], [0], [1], [0, 0, 1, 1], [], []>} : vector<16x16xbf16>, vector<16x32xbf16>, vector<16x32xf32> -> vector<16x32xf32>
    %76 = vector.broadcast %19 : vector<1x32xf32> to vector<16x32xf32>
    %77 = arith.addf %75, %76 : vector<16x32xf32>
    %c0_31 = arith.constant 0 : index
    %c0_32 = arith.constant 0 : index
    %c32 = arith.constant 32 : index
    %78 = vector.load %arg8[%c0_31, %c0_32, %c32] : memref<1x16x128xf32, #tpu.memory_space<vmem>>, vector<1x16x32xf32>
    %79 = vector.shape_cast %78 : vector<1x16x32xf32> to vector<16x32xf32>
    %80 = vector.shape_cast %77 : vector<16x32xf32> to vector<1x16x32xf32>
    tpu.vector_store %arg8[%c0_31, %c0_32, %c32], %80 {strides = array<i32>} : memref<1x16x128xf32, #tpu.memory_space<vmem>>, vector<1x16x32xf32>,
    %81 = vector.extract_strided_slice %17 {offsets = [0, 2], sizes = [16, 1], strides = [1, 1]} : vector<16x4xf32> to vector<16x1xf32>
    %82 = vector.extract_strided_slice %22 {offsets = [2, 0], sizes = [1, 16], strides = [1, 1]} : vector<4x16xf32> to vector<1x16xf32>
    %83 = vector.broadcast %81 : vector<16x1xf32> to vector<16x16xf32>
    %84 = vector.broadcast %82 : vector<1x16xf32> to vector<16x16xf32>
    %85 = arith.addf %83, %84 : vector<16x16xf32>
    %cst_33 = arith.constant 0.000000e+00 : f32
    %86 = vector.broadcast %cst_33 : f32 to vector<16x16xf32>
    %87 = arith.cmpf oge, %85, %86 : vector<16x16xf32>
    %cst_34 = arith.constant 2.000000e-01 : f32
    %88 = vector.broadcast %cst_34 : f32 to vector<16x16xf32>
    %89 = arith.mulf %88, %85 : vector<16x16xf32>
    %90 = arith.select %87, %85, %89 : vector<16x16xi1>, vector<16x16xf32>
    %91 = arith.addf %90, %21 : vector<16x16xf32>
    %cst_35 = arith.constant dense<0xFF800000> : vector<16xf32>
    %92 = vector.multi_reduction <maximumf>, %91, %cst_35 [1] : vector<16x16xf32> to vector<16xf32>
    %93 = vector.shape_cast %92 : vector<16xf32> to vector<16x1xf32>
    %94 = vector.broadcast %93 : vector<16x1xf32> to vector<16x16xf32>
    %95 = arith.subf %91, %94 : vector<16x16xf32>
    %96 = math.exp %95 : vector<16x16xf32>
    %cst_36 = arith.constant dense<0.000000e+00> : vector<16xf32>
    %97 = vector.multi_reduction <add>, %96, %cst_36 [1] : vector<16x16xf32> to vector<16xf32>
    %98 = vector.shape_cast %97 : vector<16xf32> to vector<16x1xf32>
    %99 = tpu.reciprocal %98 {approx = true} : vector<16x1xf32> -> vector<16x1xf32>
    %100 = vector.broadcast %99 : vector<16x1xf32> to vector<16x16xf32>
    %101 = arith.mulf %96, %100 : vector<16x16xf32>
    %102 = arith.truncf %101 : vector<16x16xf32> to vector<16x16xbf16>
    %103 = vector.extract_strided_slice %5 {offsets = [0, 64], sizes = [16, 32], strides = [1, 1]} : vector<16x128xbf16> to vector<16x32xbf16>
    %cst_37 = arith.constant dense<0.000000e+00> : vector<16x32xf32>
    %104 = tpu.matmul %102, %103, %cst_37 {dimension_numbers = #tpu.dot_dimension_numbers<[1], [0], [0], [1], [0, 0, 1, 1], [], []>} : vector<16x16xbf16>, vector<16x32xbf16>, vector<16x32xf32> -> vector<16x32xf32>
    %105 = vector.broadcast %19 : vector<1x32xf32> to vector<16x32xf32>
    %106 = arith.addf %104, %105 : vector<16x32xf32>
    %c0_38 = arith.constant 0 : index
    %c0_39 = arith.constant 0 : index
    %c64 = arith.constant 64 : index
    %107 = vector.load %arg8[%c0_38, %c0_39, %c64] : memref<1x16x128xf32, #tpu.memory_space<vmem>>, vector<1x16x32xf32>
    %108 = vector.shape_cast %107 : vector<1x16x32xf32> to vector<16x32xf32>
    %109 = vector.shape_cast %106 : vector<16x32xf32> to vector<1x16x32xf32>
    tpu.vector_store %arg8[%c0_38, %c0_39, %c64], %109 {strides = array<i32>} : memref<1x16x128xf32, #tpu.memory_space<vmem>>, vector<1x16x32xf32>,
    %110 = vector.extract_strided_slice %17 {offsets = [0, 3], sizes = [16, 1], strides = [1, 1]} : vector<16x4xf32> to vector<16x1xf32>
    %111 = vector.extract_strided_slice %22 {offsets = [3, 0], sizes = [1, 16], strides = [1, 1]} : vector<4x16xf32> to vector<1x16xf32>
    %112 = vector.broadcast %110 : vector<16x1xf32> to vector<16x16xf32>
    %113 = vector.broadcast %111 : vector<1x16xf32> to vector<16x16xf32>
    %114 = arith.addf %112, %113 : vector<16x16xf32>
    %cst_40 = arith.constant 0.000000e+00 : f32
    %115 = vector.broadcast %cst_40 : f32 to vector<16x16xf32>
    %116 = arith.cmpf oge, %114, %115 : vector<16x16xf32>
    %cst_41 = arith.constant 2.000000e-01 : f32
    %117 = vector.broadcast %cst_41 : f32 to vector<16x16xf32>
    %118 = arith.mulf %117, %114 : vector<16x16xf32>
    %119 = arith.select %116, %114, %118 : vector<16x16xi1>, vector<16x16xf32>
    %120 = arith.addf %119, %21 : vector<16x16xf32>
    %cst_42 = arith.constant dense<0xFF800000> : vector<16xf32>
    %121 = vector.multi_reduction <maximumf>, %120, %cst_42 [1] : vector<16x16xf32> to vector<16xf32>
    %122 = vector.shape_cast %121 : vector<16xf32> to vector<16x1xf32>
    %123 = vector.broadcast %122 : vector<16x1xf32> to vector<16x16xf32>
    %124 = arith.subf %120, %123 : vector<16x16xf32>
    %125 = math.exp %124 : vector<16x16xf32>
    %cst_43 = arith.constant dense<0.000000e+00> : vector<16xf32>
    %126 = vector.multi_reduction <add>, %125, %cst_43 [1] : vector<16x16xf32> to vector<16xf32>
    %127 = vector.shape_cast %126 : vector<16xf32> to vector<16x1xf32>
    %128 = tpu.reciprocal %127 {approx = true} : vector<16x1xf32> -> vector<16x1xf32>
    %129 = vector.broadcast %128 : vector<16x1xf32> to vector<16x16xf32>
    %130 = arith.mulf %125, %129 : vector<16x16xf32>
    %131 = arith.truncf %130 : vector<16x16xf32> to vector<16x16xbf16>
    %132 = vector.extract_strided_slice %5 {offsets = [0, 96], sizes = [16, 32], strides = [1, 1]} : vector<16x128xbf16> to vector<16x32xbf16>
    %cst_44 = arith.constant dense<0.000000e+00> : vector<16x32xf32>
    %133 = tpu.matmul %131, %132, %cst_44 {dimension_numbers = #tpu.dot_dimension_numbers<[1], [0], [0], [1], [0, 0, 1, 1], [], []>} : vector<16x16xbf16>, vector<16x32xbf16>, vector<16x32xf32> -> vector<16x32xf32>
    %134 = vector.broadcast %19 : vector<1x32xf32> to vector<16x32xf32>
    %135 = arith.addf %133, %134 : vector<16x32xf32>
    %c0_45 = arith.constant 0 : index
    %c0_46 = arith.constant 0 : index
    %c96 = arith.constant 96 : index
    %136 = vector.load %arg8[%c0_45, %c0_46, %c96] : memref<1x16x128xf32, #tpu.memory_space<vmem>>, vector<1x16x32xf32>
    %137 = vector.shape_cast %136 : vector<1x16x32xf32> to vector<16x32xf32>
    %138 = vector.shape_cast %135 : vector<16x32xf32> to vector<1x16x32xf32>
    tpu.vector_store %arg8[%c0_45, %c0_46, %c96], %138 {strides = array<i32>} : memref<1x16x128xf32, #tpu.memory_space<vmem>>, vector<1x16x32xf32>,
    return
  }
  func.func @transform_0(%arg0: i32) -> (i32, i32, i32) {
    %c0_i32 = arith.constant 0 : i32
    %c0_i32_0 = arith.constant 0 : i32
    %c0_i32_1 = arith.constant 0 : i32
    return %arg0, %c0_i32, %c0_i32_0 : i32, i32, i32
  }
  func.func @transform_1(%arg0: i32) -> (i32, i32) {
    %c0_i32 = arith.constant 0 : i32
    %c0_i32_0 = arith.constant 0 : i32
    %c0_i32_1 = arith.constant 0 : i32
    return %c0_i32, %c0_i32_0 : i32, i32
  }
  func.func @transform_2(%arg0: i32) -> (i32, i32) {
    %c0_i32 = arith.constant 0 : i32
    %c0_i32_0 = arith.constant 0 : i32
    %c0_i32_1 = arith.constant 0 : i32
    return %c0_i32, %c0_i32_0 : i32, i32
  }
  func.func @transform_3(%arg0: i32) -> (i32, i32) {
    %c0_i32 = arith.constant 0 : i32
    %c0_i32_0 = arith.constant 0 : i32
    %c0_i32_1 = arith.constant 0 : i32
    return %c0_i32, %c0_i32_0 : i32, i32
  }
  func.func @transform_4(%arg0: i32) -> (i32, i32, i32) {
    %c0_i32 = arith.constant 0 : i32
    %c0_i32_0 = arith.constant 0 : i32
    %c0_i32_1 = arith.constant 0 : i32
    return %arg0, %c0_i32, %c0_i32_0 : i32, i32, i32
  }
  func.func @transform_5(%arg0: i32) -> (i32, i32, i32) {
    %c0_i32 = arith.constant 0 : i32
    %c0_i32_0 = arith.constant 0 : i32
    %c0_i32_1 = arith.constant 0 : i32
    return %arg0, %c0_i32, %c0_i32_0 : i32, i32, i32
  }
  func.func @transform_6(%arg0: i32) -> (i32, i32) {
    %c0_i32 = arith.constant 0 : i32
    %c0_i32_0 = arith.constant 0 : i32
    %c0_i32_1 = arith.constant 0 : i32
    return %c0_i32, %c0_i32_0 : i32, i32
  }
  func.func @transform_7(%arg0: i32) -> (i32, i32, i32) {
    %c0_i32 = arith.constant 0 : i32
    %c0_i32_0 = arith.constant 0 : i32
    %c0_i32_1 = arith.constant 0 : i32
    return %arg0, %c0_i32, %c0_i32_0 : i32, i32, i32
  }
}

</mosaic_0001>

<llo_original>
// kernel: tpu_custom_call.1
$region0: #{tpu_custom_call.1}
  #allocation0 [shape = 'u32[]', space=smem, size = 0x4, offset = 0x4, fixed_abs, tag = 'smem constant byte address 0x4 - core index']
  #allocation1 [shape = 'u32[72,128]{1,0:T(1,128)}', space=vmem, size = 0x9000, scoped, tag = 'internal scratch']
  %s0 = inlined_call_operand.vmem [shape: bf16[2,16,32], index: 0, kind: input, shape index: {}]
  %s1 = inlined_call_operand.vmem [shape: bf16[32,128], index: 1, kind: input, shape index: {}]
  %s2 = inlined_call_operand.vmem [shape: f32[4,256], index: 2, kind: input, shape index: {}]
  %s3 = inlined_call_operand.vmem [shape: f32[128,4], index: 3, kind: input, shape index: {}]
  %s4 = inlined_call_operand.vmem [shape: f32[2,16,4], index: 4, kind: input, shape index: {}]
  %s5 = inlined_call_operand.vmem [shape: f32[2,16,16], index: 5, kind: input, shape index: {}]
  %s6 = inlined_call_operand.vmem [shape: f32[1,32], index: 6, kind: input, shape index: {}]
  %s7 = inlined_call_operand.hbm [shape: f32[2,16,128], index: 7, kind: output, shape index: {}]
  %s8 = sld [smem:[#allocation0]]
  $region61: #{tpu_custom_call.1} parent=0
    _
  %s10 = ssub.s32 1, %s8
  %s11 = scalar_select 0, %s10, %s8
  $region1: #{tpu_custom_call.1} parent=0
    #allocation2 [shape = 'u8[16384]{0}', space=vmem, size = 0x4000, scoped, tag = 'output window, operand 0']
    #allocation3 [shape = 's32[2]{0}', space=sflag, size = 0x8, scoped, tag = 'scoped memory for tpu_custom_call.1']
    %12 = vsyncpa [#allocation3], 0
    %s13 = scalar_lea.sflag [#allocation3], 1
    %14 = vsyncpa %s13, 0
    loop: start=0, step=1, limit=4
    $region2: #{tpu_custom_call.1} parent=1 // loop_pre_header
      _
    $region3: #{tpu_custom_call.1} parent=1 // loop_header
      %s16 = sphi 0, %s20
      %p17 = scmp.ge.s32.totalorder %s16, 4
      %s26 = sphi 0, %s28
      %s29 = sphi 0, %s26
      %s30 = sphi 0, %s29
      %s46 = sphi 0, %s30
      %s50 = sphi 0, %s50
      %s52 = sphi 0, %s50
      %s53 = sphi 0, %s52
      %s67 = sphi 0, %s53
      %s71 = sphi 0, %s71
      %s73 = sphi 0, %s71
      %s74 = sphi 0, %s73
      %s88 = sphi 0, %s74
      %s92 = sphi 0, %s92
      %s94 = sphi 0, %s92
      %s95 = sphi 0, %s94
      %s109 = sphi 0, %s95
      %s115 = sphi 0, %s117
      %s118 = sphi 0, %s115
      %s119 = sphi 0, %s118
      %s135 = sphi 0, %s119
      %s141 = sphi 0, %s143
      %s144 = sphi 0, %s141
      %s145 = sphi 0, %s144
      %s161 = sphi 0, %s145
      %s165 = sphi 0, %s165
      %s167 = sphi 0, %s165
      %s168 = sphi 0, %s167
      %s182 = sphi 0, %s168
      %s188 = sphi 0, %s190
      %s191 = sphi 0, %s188
      %s192 = sphi 0, %s191
      %s208 = sphi 0, %s192
    $region4: #{tpu_custom_call.1} parent=1 // loop_header_branch
      %19 = sbr.rel (%p17) target = $region8
    $region5: #{tpu_custom_call.1} parent=1 // loop_body
      %s21 = ssub.s32 %s16, 1
      %s22 = ssub.s32 %s16, 2
      %s23 = sadd.s32 %s16, 1
      %s24 = ssub.s32 %s16, %s23
      %p25 = scmp.eq.s32.totalorder %s24, 0
      %s27 = sadd.s32 %s26, 1
      %s28 = scalar_select %p25, %s26, %s27
      %p31 = pneg %p25
      %p32 = scmp.eq.s32.totalorder %s16, 1
      %p33 = por %p31, %p32
      %p34 = scmp.ne.s32.totalorder %s26, %s29
      %p35 = scmp.eq.s32.totalorder %s16, 0
      %p36 = por %p34, %p35
      %p37 = scmp.ne.s32.totalorder %s26, %s29
      %p38 = scmp.eq.s32.totalorder %s21, 1
      %p39 = por %p37, %p38
      %p40 = scmp.ne.s32.totalorder %s29, %s30
      %p41 = scmp.eq.s32.totalorder %s21, 0
      %p42 = por %p40, %p41
      %p43 = scmp.ne.s32.totalorder %s29, %s30
      %p44 = scmp.eq.s32.totalorder %s22, 1
      %p45 = por %p43, %p44
      %p47 = scmp.ne.s32.totalorder %s30, %s46
      %p48 = scmp.eq.s32.totalorder %s22, 0
      %p49 = por %p47, %p48
      %s51 = sadd.s32 %s50, 1
      %p54 = scmp.eq.s32.totalorder %s16, 1
      %p55 = scmp.ne.s32.totalorder %s50, %s52
      %p56 = scmp.eq.s32.totalorder %s16, 0
      %p57 = por %p55, %p56
      %p58 = scmp.ne.s32.totalorder %s50, %s52
      %p59 = scmp.eq.s32.totalorder %s21, 1
      %p60 = por %p58, %p59
      %p61 = scmp.ne.s32.totalorder %s52, %s53
      %p62 = scmp.eq.s32.totalorder %s21, 0
      %p63 = por %p61, %p62
      %p64 = scmp.ne.s32.totalorder %s52, %s53
      %p65 = scmp.eq.s32.totalorder %s22, 1
      %p66 = por %p64, %p65
      %p68 = scmp.ne.s32.totalorder %s53, %s67
      %p69 = scmp.eq.s32.totalorder %s22, 0
      %p70 = por %p68, %p69
      %s72 = sadd.s32 %s71, 1
      %p75 = scmp.eq.s32.totalorder %s16, 1
      %p76 = scmp.ne.s32.totalorder %s71, %s73
      %p77 = scmp.eq.s32.totalorder %s16, 0
      %p78 = por %p76, %p77
      %p79 = scmp.ne.s32.totalorder %s71, %s73
      %p80 = scmp.eq.s32.totalorder %s21, 1
      %p81 = por %p79, %p80
      %p82 = scmp.ne.s32.totalorder %s73, %s74
      %p83 = scmp.eq.s32.totalorder %s21, 0
      %p84 = por %p82, %p83
      %p85 = scmp.ne.s32.totalorder %s73, %s74
      %p86 = scmp.eq.s32.totalorder %s22, 1
      %p87 = por %p85, %p86
      %p89 = scmp.ne.s32.totalorder %s74, %s88
      %p90 = scmp.eq.s32.totalorder %s22, 0
      %p91 = por %p89, %p90
      %s93 = sadd.s32 %s92, 1
      %p96 = scmp.eq.s32.totalorder %s16, 1
      %p97 = scmp.ne.s32.totalorder %s92, %s94
      %p98 = scmp.eq.s32.totalorder %s16, 0
      %p99 = por %p97, %p98
      %p100 = scmp.ne.s32.totalorder %s92, %s94
      %p101 = scmp.eq.s32.totalorder %s21, 1
      %p102 = por %p100, %p101
      %p103 = scmp.ne.s32.totalorder %s94, %s95
      %p104 = scmp.eq.s32.totalorder %s21, 0
      %p105 = por %p103, %p104
      %p106 = scmp.ne.s32.totalorder %s94, %s95
      %p107 = scmp.eq.s32.totalorder %s22, 1
      %p108 = por %p106, %p107
      %p110 = scmp.ne.s32.totalorder %s95, %s109
      %p111 = scmp.eq.s32.totalorder %s22, 0
      %p112 = por %p110, %p111
      %s113 = ssub.s32 %s16, %s23
      %p114 = scmp.eq.s32.totalorder %s113, 0
      %s116 = sadd.s32 %s115, 1
      %s117 = scalar_select %p114, %s115, %s116
      %p120 = pneg %p114
      %p121 = scmp.eq.s32.totalorder %s16, 1
      %p122 = por %p120, %p121
      %p123 = scmp.ne.s32.totalorder %s115, %s118
      %p124 = scmp.eq.s32.totalorder %s16, 0
      %p125 = por %p123, %p124
      %p126 = scmp.ne.s32.totalorder %s115, %s118
      %p127 = scmp.eq.s32.totalorder %s21, 1
      %p128 = por %p126, %p127
      %p129 = scmp.ne.s32.totalorder %s118, %s119
      %p130 = scmp.eq.s32.totalorder %s21, 0
      %p131 = por %p129, %p130
      %p132 = scmp.ne.s32.totalorder %s118, %s119
      %p133 = scmp.eq.s32.totalorder %s22, 1
      %p134 = por %p132, %p133
      %p136 = scmp.ne.s32.totalorder %s119, %s135
      %p137 = scmp.eq.s32.totalorder %s22, 0
      %p138 = por %p136, %p137
      %s139 = ssub.s32 %s16, %s23
      %p140 = scmp.eq.s32.totalorder %s139, 0
      %s142 = sadd.s32 %s141, 1
      %s143 = scalar_select %p140, %s141, %s142
      %p146 = pneg %p140
      %p147 = scmp.eq.s32.totalorder %s16, 1
      %p148 = por %p146, %p147
      %p149 = scmp.ne.s32.totalorder %s141, %s144
      %p150 = scmp.eq.s32.totalorder %s16, 0
      %p151 = por %p149, %p150
      %p152 = scmp.ne.s32.totalorder %s141, %s144
      %p153 = scmp.eq.s32.totalorder %s21, 1
      %p154 = por %p152, %p153
      %p155 = scmp.ne.s32.totalorder %s144, %s145
      %p156 = scmp.eq.s32.totalorder %s21, 0
      %p157 = por %p155, %p156
      %p158 = scmp.ne.s32.totalorder %s144, %s145
      %p159 = scmp.eq.s32.totalorder %s22, 1
      %p160 = por %p158, %p159
      %p162 = scmp.ne.s32.totalorder %s145, %s161
      %p163 = scmp.eq.s32.totalorder %s22, 0
      %p164 = por %p162, %p163
      %s166 = sadd.s32 %s165, 1
      %p169 = scmp.eq.s32.totalorder %s16, 1
      %p170 = scmp.ne.s32.totalorder %s165, %s167
      %p171 = scmp.eq.s32.totalorder %s16, 0
      %p172 = por %p170, %p171
      %p173 = scmp.ne.s32.totalorder %s165, %s167
      %p174 = scmp.eq.s32.totalorder %s21, 1
      %p175 = por %p173, %p174
      %p176 = scmp.ne.s32.totalorder %s167, %s168
      %p177 = scmp.eq.s32.totalorder %s21, 0
      %p178 = por %p176, %p177
      %p179 = scmp.ne.s32.totalorder %s167, %s168
      %p180 = scmp.eq.s32.totalorder %s22, 1
      %p181 = por %p179, %p180
      %p183 = scmp.ne.s32.totalorder %s168, %s182
      %p184 = scmp.eq.s32.totalorder %s22, 0
      %p185 = por %p183, %p184
      %s186 = ssub.s32 %s16, %s23
      %p187 = scmp.eq.s32.totalorder %s186, 0
      %s189 = sadd.s32 %s188, 1
      %s190 = scalar_select %p187, %s188, %s189
      %p193 = pneg %p187
      %p194 = scmp.eq.s32.totalorder %s16, 1
      %p195 = por %p193, %p194
      %p196 = scmp.ne.s32.totalorder %s188, %s191
      %p197 = scmp.eq.s32.totalorder %s16, 0
      %p198 = por %p196, %p197
      %p199 = scmp.ne.s32.totalorder %s188, %s191
      %p200 = scmp.eq.s32.totalorder %s21, 1
      %p201 = por %p199, %p200
      %p202 = scmp.ne.s32.totalorder %s191, %s192
      %p203 = scmp.eq.s32.totalorder %s21, 0
      %p204 = por %p202, %p203
      %p205 = scmp.ne.s32.totalorder %s191, %s192
      %p206 = scmp.eq.s32.totalorder %s22, 1
      %p207 = por %p205, %p206
      %p209 = scmp.ne.s32.totalorder %s192, %s208
      %p210 = scmp.eq.s32.totalorder %s22, 0
      %p211 = por %p209, %p210
      %p212 = scmp.le.s32.totalorder 1, %s16
      %p213 = scmp.lt.s32.totalorder %s16, 3
      %p214 = pnand %p212, %p213
      %p215 = pneg %p214
      // Predicated region
      $region9: #{tpu_custom_call.1} parent=5 // pred_check
        _
      $region10: #{tpu_custom_call.1} parent=5 // pred_check_branch
        %217 = sbr.rel (%p214) target = $region12
      $region11: #{tpu_custom_call.1} parent=5 // pred_region
        %s218 = ssub.s32 %s16, 1
        // Predicated region
        $region13: #{tpu_custom_call.1} parent=11 // pred_check
          %p219 = pneg %p63
        $region14: #{tpu_custom_call.1} parent=11 // pred_check_branch
          %221 = sbr.rel (%p219) target = $region16
        $region15: #{tpu_custom_call.1} parent=11 // pred_region
          _
        $region16: #{tpu_custom_call.1} parent=11 // pred_fallthru
          _
        // Predicated region
        $region17: #{tpu_custom_call.1} parent=11 // pred_check
          %p222 = pneg %p84
        $region18: #{tpu_custom_call.1} parent=11 // pred_check_branch
          %224 = sbr.rel (%p222) target = $region20
        $region19: #{tpu_custom_call.1} parent=11 // pred_region
          _
        $region20: #{tpu_custom_call.1} parent=11 // pred_fallthru
          _
        // Predicated region
        $region21: #{tpu_custom_call.1} parent=11 // pred_check
          %p225 = pneg %p105
        $region22: #{tpu_custom_call.1} parent=11 // pred_check_branch
          %227 = sbr.rel (%p225) target = $region24
        $region23: #{tpu_custom_call.1} parent=11 // pred_region
          _
        $region24: #{tpu_custom_call.1} parent=11 // pred_fallthru
          _
        // Predicated region
        $region25: #{tpu_custom_call.1} parent=11 // pred_check
          %p228 = pneg %p178
        $region26: #{tpu_custom_call.1} parent=11 // pred_check_branch
          %230 = sbr.rel (%p228) target = $region28
        $region27: #{tpu_custom_call.1} parent=11 // pred_region
          _
        $region28: #{tpu_custom_call.1} parent=11 // pred_fallthru
          _
      $region12: #{tpu_custom_call.1} parent=5 // pred_fallthru
        _
      %p231 = scmp.lt.s32.totalorder %s16, 2
      // Predicated region
      $region29: #{tpu_custom_call.1} parent=5 // pred_check
        %p232 = pneg %p231
      $region30: #{tpu_custom_call.1} parent=5 // pred_check_branch
        %234 = sbr.rel (%p232) target = $region32
      $region31: #{tpu_custom_call.1} parent=5 // pred_region
        // Predicated region
        $region33: #{tpu_custom_call.1} parent=31 // pred_check
          %p235 = pneg %p36
        $region34: #{tpu_custom_call.1} parent=31 // pred_check_branch
          %237 = sbr.rel (%p235) target = $region36
        $region35: #{tpu_custom_call.1} parent=31 // pred_region
          %p238 = scmp.lt.s32.totalorder %s16, 1
          %s239 = scalar_select %p238, %s16, 1
          %s240 = smul.addr %s239, 2
          %s241 = smul.addr %s240, 4
          %s242 = scalar_lea.vmem %s0, %s241
        $region36: #{tpu_custom_call.1} parent=31 // pred_fallthru
          _
        // Predicated region
        $region37: #{tpu_custom_call.1} parent=31 // pred_check
          %p243 = pneg %p125
        $region38: #{tpu_custom_call.1} parent=31 // pred_check_branch
          %245 = sbr.rel (%p243) target = $region40
        $region39: #{tpu_custom_call.1} parent=31 // pred_region
          %p246 = scmp.lt.s32.totalorder %s16, 1
          %s247 = scalar_select %p246, %s16, 1
          %s248 = smul.addr %s247, 2
          %s249 = smul.addr %s248, 8
          %s250 = scalar_lea.vmem %s4, %s249
        $region40: #{tpu_custom_call.1} parent=31 // pred_fallthru
          _
        // Predicated region
        $region41: #{tpu_custom_call.1} parent=31 // pred_check
          %p251 = pneg %p151
        $region42: #{tpu_custom_call.1} parent=31 // pred_check_branch
          %253 = sbr.rel (%p251) target = $region44
        $region43: #{tpu_custom_call.1} parent=31 // pred_region
          %p254 = scmp.lt.s32.totalorder %s16, 1
          %s255 = scalar_select %p254, %s16, 1
          %s256 = smul.addr %s255, 2
          %s257 = smul.addr %s256, 8
          %s258 = scalar_lea.vmem %s5, %s257
        $region44: #{tpu_custom_call.1} parent=31 // pred_fallthru
          _
      $region32: #{tpu_custom_call.1} parent=5 // pred_fallthru
        _
      %p259 = scmp.le.s32.totalorder 1, %s16
      %p260 = scmp.lt.s32.totalorder %s16, 3
      %p261 = pnand %p259, %p260
      %p262 = pneg %p261
      // Predicated region
      $region45: #{tpu_custom_call.1} parent=5 // pred_check
        _
      $region46: #{tpu_custom_call.1} parent=5 // pred_check_branch
        %264 = sbr.rel (%p261) target = $region48
      $region47: #{tpu_custom_call.1} parent=5 // pred_region
        %s265 = ssub.s32 %s16, 1
        %p266 = scmp.lt.s32.totalorder %s21, 1
        %s267 = scalar_select %p266, %s21, 1
        %s268 = smul.addr %s267, 2
        %s269 = smul.addr %s268, 4
        %s270 = scalar_lea.vmem %s0, %s269
        %p271 = pneg %p42
        %p272 = pneg %p39
        %p273 = pneg %p63
        %p274 = pneg %p60
        %p275 = pneg %p84
        %p276 = pneg %p81
        %p277 = pneg %p105
        %p278 = pneg %p102
        %p279 = scmp.lt.s32.totalorder %s21, 1
        %s280 = scalar_select %p279, %s21, 1
        %s281 = smul.addr %s280, 2
        %s282 = smul.addr %s281, 8
        %s283 = scalar_lea.vmem %s4, %s282
        %p284 = pneg %p131
        %p285 = pneg %p128
        %p286 = scmp.lt.s32.totalorder %s21, 1
        %s287 = scalar_select %p286, %s21, 1
        %s288 = smul.addr %s287, 2
        %s289 = smul.addr %s288, 8
        %s290 = scalar_lea.vmem %s5, %s289
        %p291 = pneg %p157
        %p292 = pneg %p154
        %p293 = pneg %p178
        %p294 = pneg %p175
        %p295 = pneg %p204
        %p296 = pneg %p201
        %s297 = sand.u32 %s191, 1
        %s298 = scalar_lea.sflag [#allocation3], %s297
        %s299 = sand.u32 %s191, 1
        %s300 = smul.addr %s299, 16
        %s301 = scalar_lea.vmem [#allocation2], %s300
        %p302 = scmp.lt.s32.totalorder %s21, 1
        %s303 = scalar_select %p302, %s21, 1
        %s304 = smul.addr %s303, 2
        %s305 = smul.addr %s304, 4
        %s306 = scalar_lea.vmem %s0, %s305
        %p307 = scmp.lt.s32.totalorder %s21, 1
        %s308 = scalar_select %p307, %s21, 1
        %s309 = smul.addr %s308, 2
        %s310 = smul.addr %s309, 8
        %s311 = scalar_lea.vmem %s4, %s310
        %p312 = scmp.lt.s32.totalorder %s21, 1
        %s313 = scalar_select %p312, %s21, 1
        %s314 = smul.addr %s313, 2
        %s315 = smul.addr %s314, 8
        %s316 = scalar_lea.vmem %s5, %s315
        %v318 = vld [vmem:[%s306] sm:$0xf]
        %v319 = vld [vmem:[%s306 + $0x4] sm:$0xf]
        %v320 = vld [vmem:[%s1] sm:$0xf]
        %v321 = vld [vmem:[%s1 + $0x4] sm:$0xf]
        %v322 = vld [vmem:[%s1 + $0x8] sm:$0xf]
        %v323 = vld [vmem:[%s1 + $0xc] sm:$0xf]
        %v326 = vunpack.c.l.b16 %v318
        %v327 = vunpack.c.l.b16 %v319
        %v328 = vpack.c.b16 %v327, %v326
        %v333 = vunpack.c.l.b16 %v320
        %v334 = vunpack.c.l.b16 %v321
        %v335 = vunpack.c.l.b16 %v322
        %v336 = vunpack.c.l.b16 %v323
        %v337 = vpack.c.b16 %v334, %v333
        %v338 = vpack.c.b16 %v336, %v335
        %vm341 = vcmask 261120
        %v343 = vsel %vm341, %v328, 0
        %345 = vmatpush.bf16.msra.mxu0 0
        %346 = vmatpush.bf16.msra.mxu0 0
        %347 = vmatpush.bf16.msra.mxu0 0
        %348 = vmatpush.bf16.msra.mxu0 0
        %349 = vmatpush.bf16.msra.mxu0 0
        %350 = vmatpush.bf16.msra.mxu0 0
        %351 = vmatpush.bf16.msra.mxu0 %v338
        %352 = vmatpush.bf16.msra.mxu0 %v337
        %353 = vmatmul.bf16.gmra.mxu0 %v343
        %v354 = vpop.f32.mrf.mxu0
        %v355 = vadd.f32 0.0, %v354
        %v356 = vpop.f32.mrf.mxu0
        %v357 = vadd.f32 0.0, %v356
        %358 = vdwg.mxu0
        %v359 = vtanh.pop %v355
        %v360 = vtanh.pop %v357
        %v361 = vpack.c.bf16 %v355, %v355
        %v362 = vpack.c.bf16 %v357, %v357
        %v363 = vld [vmem:[%s311] sm:$0xff]
        %v364 = vld [vmem:[%s311 + $0x8] sm:$0xff]
        %v365 = vld [vmem:[%s2] sm:$0xff]
        %367 = vst [vmem:[#allocation1] ss:$2 sm:$0xff] %v365
        %v368 = vld.sshfl [vmem:[#allocation1] sm:$0xff pattern:$0x75316420]
        %v369 = vld.sshfl [vmem:[#allocation1 + $0x8] sm:$0xff pattern:$0x75316420]
        %vm370 = vcmask 31744
        %v372 = vsel %vm370, %v363, 0
        %v375 = vsel %vm370, %v364, 0
        %vm377 = vcmask 1043456
        %v378 = vsel %vm377, %v368, 0
        %v380 = vsel %vm377, %v369, 0
        %382 = vmatpush.msra.mxu0 0.0
        %383 = vmatpush.msra.mxu0 0.0
        %384 = vmatpush.msra.mxu0 0.0
        %385 = vmatpush.msra.mxu0 0.0
        %386 = vmatpush.msra.mxu0 0.0
        %387 = vmatpush.msra.mxu0 0.0
        %388 = vmatpush.msra.mxu0 0.0
        %389 = vmatpush.msra.mxu0 0.0
        %390 = vmatpush.msra.mxu0 0.0
        %391 = vmatpush.msra.mxu0 0.0
        %392 = vmatpush.msra.mxu0 0.0
        %393 = vmatpush.msra.mxu0 0.0
        %394 = vmatpush.msra.mxu0 0.0
        %395 = vmatpush.msra.mxu0 0.0
        %396 = vmatpush.msra.mxu0 0.0
        %397 = vmatpush.msra.mxu0 %v378
        %398 = vmatmul.f32.gmra.mxu0 %v372
        %v399 = vpop.f32.mrf.mxu0
        %v400 = vadd.f32 0.0, %v399
        %401 = vmatmul.f32.gmra.mxu0 %v375
        %v402 = vpop.f32.mrf.mxu0
        %v403 = vadd.f32 0.0, %v402
        %404 = vdwg.mxu0
        %405 = vmatpush.msra.mxu0 0.0
        %406 = vmatpush.msra.mxu0 0.0
        %407 = vmatpush.msra.mxu0 0.0
        %408 = vmatpush.msra.mxu0 0.0
        %409 = vmatpush.msra.mxu0 0.0
        %410 = vmatpush.msra.mxu0 0.0
        %411 = vmatpush.msra.mxu0 0.0
        %412 = vmatpush.msra.mxu0 0.0
        %413 = vmatpush.msra.mxu0 0.0
        %414 = vmatpush.msra.mxu0 0.0
        %415 = vmatpush.msra.mxu0 0.0
        %416 = vmatpush.msra.mxu0 0.0
        %417 = vmatpush.msra.mxu0 0.0
        %418 = vmatpush.msra.mxu0 0.0
        %419 = vmatpush.msra.mxu0 0.0
        %420 = vmatpush.msra.mxu0 %v380
        %421 = vmatmul.f32.gmra.mxu0 %v372
        %v422 = vpop.f32.mrf.mxu0
        %v423 = vadd.f32 0.0, %v422
        %424 = vmatmul.f32.gmra.mxu0 %v375
        %v425 = vpop.f32.mrf.mxu0
        %v426 = vadd.f32 0.0, %v425
        %427 = vdwg.mxu0
        %v428 = vmul.f32 %v359, %v400
        %v429 = vmul.f32 %v360, %v403
        %v430 = vmul.f32 %v359, %v423
        %v431 = vmul.f32 %v360, %v426
        %v432 = vld [vmem:[%s3] sm:$0xff]
        %v433 = vld [vmem:[%s3 + $0x8] sm:$0xff]
        %v434 = vld [vmem:[%s3 + $0x10] sm:$0xff]
        %v435 = vld [vmem:[%s3 + $0x18] sm:$0xff]
        %v436 = vld [vmem:[%s3 + $0x20] sm:$0xff]
        %v437 = vld [vmem:[%s3 + $0x28] sm:$0xff]
        %v438 = vld [vmem:[%s3 + $0x30] sm:$0xff]
        %v439 = vld [vmem:[%s3 + $0x38] sm:$0xff]
        %v440 = vld [vmem:[%s3 + $0x40] sm:$0xff]
        %v441 = vld [vmem:[%s3 + $0x48] sm:$0xff]
        %v442 = vld [vmem:[%s3 + $0x50] sm:$0xff]
        %v443 = vld [vmem:[%s3 + $0x58] sm:$0xff]
        %v444 = vld [vmem:[%s3 + $0x60] sm:$0xff]
        %v445 = vld [vmem:[%s3 + $0x68] sm:$0xff]
        %v446 = vld [vmem:[%s3 + $0x70] sm:$0xff]
        %v447 = vld [vmem:[%s3 + $0x78] sm:$0xff]
        %448 = vmatpush.msra.mxu0 %v447
        %449 = vmatpush.msra.mxu0 %v446
        %450 = vmatpush.msra.mxu0 %v445
        %451 = vmatpush.msra.mxu0 %v444
        %452 = vmatpush.msra.mxu0 %v443
        %453 = vmatpush.msra.mxu0 %v442
        %454 = vmatpush.msra.mxu0 %v441
        %455 = vmatpush.msra.mxu0 %v440
        %456 = vmatpush.msra.mxu0 %v439
        %457 = vmatpush.msra.mxu0 %v438
        %458 = vmatpush.msra.mxu0 %v437
        %459 = vmatpush.msra.mxu0 %v436
        %460 = vmatpush.msra.mxu0 %v435
        %461 = vmatpush.msra.mxu0 %v434
        %462 = vmatpush.msra.mxu0 %v433
        %463 = vmatpush.msra.mxu0 %v432
        %464 = vmatmul.f32.gmra.mxu0 %v428
        %v465 = vpop.f32.mrf.mxu0
        %v466 = vadd.f32 0.0, %v465
        %467 = vmatmul.f32.gmra.mxu0 %v429
        %v468 = vpop.f32.mrf.mxu0
        %v469 = vadd.f32 0.0, %v468
        %470 = vmatmul.f32.gmra.mxu0 %v430
        %v471 = vpop.f32.mrf.mxu0
        %v472 = vadd.f32 0.0, %v471
        %473 = vmatmul.f32.gmra.mxu0 %v431
        %v474 = vpop.f32.mrf.mxu0
        %v475 = vadd.f32 0.0, %v474
        %476 = vdwg.mxu0
        %v477 = vld [vmem:[%s6] sm:$0x1]
        %v478 = vld [vmem:[%s316] sm:$0xff]
        %v479 = vld [vmem:[%s316 + $0x8] sm:$0xff]
        %480 = vxpose.xlu0.b32.start [1/16] %v472, 128
        %481 = vxpose.xlu0.b32.cont [2/16] %v475, 128
        %482 = vxpose.xlu0.b32.cont [3/16] 0.0, 128
        %483 = vxpose.xlu0.b32.cont [4/16] 0.0, 128
        %484 = vxpose.xlu0.b32.cont [5/16] 0.0, 128
        %485 = vxpose.xlu0.b32.cont [6/16] 0.0, 128
        %486 = vxpose.xlu0.b32.cont [7/16] 0.0, 128
        %487 = vxpose.xlu0.b32.cont [8/16] 0.0, 128
        %488 = vxpose.xlu0.b32.cont [9/16] 0.0, 128
        %489 = vxpose.xlu0.b32.cont [10/16] 0.0, 128
        %490 = vxpose.xlu0.b32.cont [11/16] 0.0, 128
        %491 = vxpose.xlu0.b32.cont [12/16] 0.0, 128
        %492 = vxpose.xlu0.b32.cont [13/16] 0.0, 128
        %493 = vxpose.xlu0.b32.cont [14/16] 0.0, 128
        %494 = vxpose.xlu0.b32.cont [15/16] 0.0, 128
        %495 = vxpose.xlu0.b32.end [16/16] 0.0, 128
        %v496 = vpop.trf.xlu0
        %v497 = vpop.trf.xlu0
        %v498 = vpop.trf.xlu0
        %v499 = vpop.trf.xlu0
        %v500 = vpop.trf.xlu0
        %v501 = vpop.trf.xlu0
        %v502 = vpop.trf.xlu0
        %v503 = vpop.trf.xlu0
        %v504 = vpop.trf.xlu0
        %v505 = vpop.trf.xlu0
        %v506 = vpop.trf.xlu0
        %v507 = vpop.trf.xlu0
        %v508 = vpop.trf.xlu0
        %v509 = vpop.trf.xlu0
        %v510 = vpop.trf.xlu0
        %v511 = vpop.trf.xlu0
        %513 = vset.pattern.permute.xlu0 0
        %514 = vperm.xlu0 %513, %v466
        %v515 = vpop.permute.xlu0 %514
        %518 = vset.pattern.permute.xlu0 0
        %519 = vperm.xlu0 %518, %v469
        %v520 = vpop.permute.xlu0 %519
        %v522 = vperm.slane %v496, 0
        %v523 = vadd.f32 %v515, %v522
        %v524 = vadd.f32 %v520, %v522
        %vm525 = vcmp.ge.f32.partialorder %v523, 0.0
        %vm526 = vcmp.ge.f32.partialorder %v524, 0.0
        %v527 = vmul.f32 %v523, 0.2
        %v528 = vmul.f32 %v524, 0.2
        %v529 = vsel %vm525, %v523, %v527
        %v530 = vsel %vm526, %v524, %v528
        %v531 = vadd.f32 %v529, %v478
        %v532 = vadd.f32 %v530, %v479
        %vm533 = vcmask 130048
        %v534 = vsel %vm533, %v531, -inf
        %535 = vmax.xlane.f32.xlu0 %v534
        %v536 = vpop.xlane.xlu0 %535
        %v537 = vsel %vm533, %v532, -inf
        %538 = vmax.xlane.f32.xlu0 %v537
        %v539 = vpop.xlane.xlu0 %538
        %v540 = vsub.f32 %v531, %v536
        %v541 = vsub.f32 %v532, %v539
        %v542 = vmul.f32 %v540, 1.442695
        %v543 = vpow.pop %v542
        %v544 = vmul.f32 %v541, 1.442695
        %v545 = vpow.pop %v544
        %v546 = vsel %vm533, %v543, 0.0
        %547 = vadd.xlane.f32.xlu0 %v546
        %v548 = vpop.xlane.xlu0 %547
        %v549 = vsel %vm533, %v545, 0.0
        %550 = vadd.xlane.f32.xlu0 %v549
        %v551 = vpop.xlane.xlu0 %550
        %v552 = vrcp.pop %v548
        %v553 = vrcp.pop %v551
        %v554 = vmul.f32 %v543, %v552
        %v555 = vmul.f32 %v545, %v553
        %v556 = vpack.c.bf16 %v555, %v554
        %v558 = vperm.slane %v477, 0
        %v562 = vunpack.c.l.b16 %v361
        %v563 = vunpack.c.l.b16 %v362
        %v564 = vpack.c.b16 %v563, %v562
        %v567 = vsel %vm533, %v556, 0
        %569 = vmatpush.bf16.msra.mxu0 0
        %570 = vmatpush.bf16.msra.mxu0 0
        %571 = vmatpush.bf16.msra.mxu0 0
        %572 = vmatpush.bf16.msra.mxu0 0
        %573 = vmatpush.bf16.msra.mxu0 0
        %574 = vmatpush.bf16.msra.mxu0 0
        %575 = vmatpush.bf16.msra.mxu0 0
        %576 = vmatpush.bf16.msra.mxu0 %v564
        %577 = vmatmul.bf16.gmra.mxu0 %v567
        %v578 = vpop.f32.mrf.mxu0
        %v579 = vadd.f32 %v558, %v578
        %v580 = vpop.f32.mrf.mxu0
        %v581 = vadd.f32 %v558, %v580
        %582 = vdwg.mxu0
        %583 = vst.msk [vmem:[%s301] sm:$0xff] %vm341, %v579
        %584 = vst.msk [vmem:[%s301 + $0x8] sm:$0xff] %vm341, %v581
        %585 = vset.pattern.permute.xlu0 1
        %586 = vperm.xlu0 %585, %v466
        %v587 = vpop.permute.xlu0 %586
        %589 = vset.pattern.permute.xlu0 1
        %590 = vperm.xlu0 %589, %v469
        %v591 = vpop.permute.xlu0 %590
        %v593 = vperm.slane %v496, 1
        %v594 = vadd.f32 %v587, %v593
        %v595 = vadd.f32 %v591, %v593
        %vm596 = vcmp.ge.f32.partialorder %v594, 0.0
        %vm597 = vcmp.ge.f32.partialorder %v595, 0.0
        %v598 = vmul.f32 %v594, 0.2
        %v599 = vmul.f32 %v595, 0.2
        %v600 = vsel %vm596, %v594, %v598
        %v601 = vsel %vm597, %v595, %v599
        %v602 = vadd.f32 %v600, %v478
        %v603 = vadd.f32 %v601, %v479
        %v604 = vsel %vm533, %v602, -inf
        %605 = vmax.xlane.f32.xlu0 %v604
        %v606 = vpop.xlane.xlu0 %605
        %v607 = vsel %vm533, %v603, -inf
        %608 = vmax.xlane.f32.xlu0 %v607
        %v609 = vpop.xlane.xlu0 %608
        %v610 = vsub.f32 %v602, %v606
        %v611 = vsub.f32 %v603, %v609
        %v612 = vmul.f32 %v610, 1.442695
        %v613 = vpow.pop %v612
        %v614 = vmul.f32 %v611, 1.442695
        %v615 = vpow.pop %v614
        %v616 = vsel %vm533, %v613, 0.0
        %617 = vadd.xlane.f32.xlu0 %v616
        %v618 = vpop.xlane.xlu0 %617
        %v619 = vsel %vm533, %v615, 0.0
        %620 = vadd.xlane.f32.xlu0 %v619
        %v621 = vpop.xlane.xlu0 %620
        %v622 = vrcp.pop %v618
        %v623 = vrcp.pop %v621
        %v624 = vmul.f32 %v613, %v622
        %v625 = vmul.f32 %v615, %v623
        %v626 = vpack.c.bf16 %v625, %v624
        %627 = vrot.lane.b32.xlu0 %v564, 96
        %v628 = vpop.permute.xlu0 %627
        %v631 = vsel %vm533, %v626, 0
        %633 = vmatpush.bf16.msra.mxu0 0
        %634 = vmatpush.bf16.msra.mxu0 0
        %635 = vmatpush.bf16.msra.mxu0 0
        %636 = vmatpush.bf16.msra.mxu0 0
        %637 = vmatpush.bf16.msra.mxu0 0
        %638 = vmatpush.bf16.msra.mxu0 0
        %639 = vmatpush.bf16.msra.mxu0 0
        %640 = vmatpush.bf16.msra.mxu0 %v628
        %641 = vmatmul.bf16.gmra.mxu0 %v631
        %v642 = vpop.f32.mrf.mxu0
        %v643 = vadd.f32 %v558, %v642
        %v644 = vpop.f32.mrf.mxu0
        %v645 = vadd.f32 %v558, %v644
        %646 = vdwg.mxu0
        %649 = vrot.lane.b32.xlu0 %v643, 32
        %v650 = vpop.permute.xlu0 %649
        %651 = vrot.lane.b32.xlu0 %v645, 32
        %v652 = vpop.permute.xlu0 %651
        %vm655 = vcmask 523520
        %656 = vst.msk [vmem:[%s301] sm:$0xff] %vm655, %v650
        %657 = vst.msk [vmem:[%s301 + $0x8] sm:$0xff] %vm655, %v652
        %658 = vset.pattern.permute.xlu0 2
        %659 = vperm.xlu0 %658, %v466
        %v660 = vpop.permute.xlu0 %659
        %662 = vset.pattern.permute.xlu0 2
        %663 = vperm.xlu0 %662, %v469
        %v664 = vpop.permute.xlu0 %663
        %v666 = vperm.slane %v496, 2
        %v667 = vadd.f32 %v660, %v666
        %v668 = vadd.f32 %v664, %v666
        %vm669 = vcmp.ge.f32.partialorder %v667, 0.0
        %vm670 = vcmp.ge.f32.partialorder %v668, 0.0
        %v671 = vmul.f32 %v667, 0.2
        %v672 = vmul.f32 %v668, 0.2
        %v673 = vsel %vm669, %v667, %v671
        %v674 = vsel %vm670, %v668, %v672
        %v675 = vadd.f32 %v673, %v478
        %v676 = vadd.f32 %v674, %v479
        %v677 = vsel %vm533, %v675, -inf
        %678 = vmax.xlane.f32.xlu0 %v677
        %v679 = vpop.xlane.xlu0 %678
        %v680 = vsel %vm533, %v676, -inf
        %681 = vmax.xlane.f32.xlu0 %v680
        %v682 = vpop.xlane.xlu0 %681
        %v683 = vsub.f32 %v675, %v679
        %v684 = vsub.f32 %v676, %v682
        %v685 = vmul.f32 %v683, 1.442695
        %v686 = vpow.pop %v685
        %v687 = vmul.f32 %v684, 1.442695
        %v688 = vpow.pop %v687
        %v689 = vsel %vm533, %v686, 0.0
        %690 = vadd.xlane.f32.xlu0 %v689
        %v691 = vpop.xlane.xlu0 %690
        %v692 = vsel %vm533, %v688, 0.0
        %693 = vadd.xlane.f32.xlu0 %v692
        %v694 = vpop.xlane.xlu0 %693
        %v695 = vrcp.pop %v691
        %v696 = vrcp.pop %v694
        %v697 = vmul.f32 %v686, %v695
        %v698 = vmul.f32 %v688, %v696
        %v699 = vpack.c.bf16 %v698, %v697
        %700 = vrot.lane.b32.xlu0 %v564, 64
        %v701 = vpop.permute.xlu0 %700
        %v704 = vsel %vm533, %v699, 0
        %706 = vmatpush.bf16.msra.mxu0 0
        %707 = vmatpush.bf16.msra.mxu0 0
        %708 = vmatpush.bf16.msra.mxu0 0
        %709 = vmatpush.bf16.msra.mxu0 0
        %710 = vmatpush.bf16.msra.mxu0 0
        %711 = vmatpush.bf16.msra.mxu0 0
        %712 = vmatpush.bf16.msra.mxu0 0
        %713 = vmatpush.bf16.msra.mxu0 %v701
        %714 = vmatmul.bf16.gmra.mxu0 %v704
        %v715 = vpop.f32.mrf.mxu0
        %v716 = vadd.f32 %v558, %v715
        %v717 = vpop.f32.mrf.mxu0
        %v718 = vadd.f32 %v558, %v717
        %719 = vdwg.mxu0
        %722 = vrot.lane.b32.xlu0 %v716, 64
        %v723 = vpop.permute.xlu0 %722
        %724 = vrot.lane.b32.xlu0 %v718, 64
        %v725 = vpop.permute.xlu0 %724
        %vm728 = vcmask 785920
        %729 = vst.msk [vmem:[%s301] sm:$0xff] %vm728, %v723
        %730 = vst.msk [vmem:[%s301 + $0x8] sm:$0xff] %vm728, %v725
        %731 = vset.pattern.permute.xlu0 3
        %732 = vperm.xlu0 %731, %v466
        %v733 = vpop.permute.xlu0 %732
        %735 = vset.pattern.permute.xlu0 3
        %736 = vperm.xlu0 %735, %v469
        %v737 = vpop.permute.xlu0 %736
        %v739 = vperm.slane %v496, 3
        %v740 = vadd.f32 %v733, %v739
        %v741 = vadd.f32 %v737, %v739
        %vm742 = vcmp.ge.f32.partialorder %v740, 0.0
        %vm743 = vcmp.ge.f32.partialorder %v741, 0.0
        %v744 = vmul.f32 %v740, 0.2
        %v745 = vmul.f32 %v741, 0.2
        %v746 = vsel %vm742, %v740, %v744
        %v747 = vsel %vm743, %v741, %v745
        %v748 = vadd.f32 %v746, %v478
        %v749 = vadd.f32 %v747, %v479
        %v750 = vsel %vm533, %v748, -inf
        %751 = vmax.xlane.f32.xlu0 %v750
        %v752 = vpop.xlane.xlu0 %751
        %v753 = vsel %vm533, %v749, -inf
        %754 = vmax.xlane.f32.xlu0 %v753
        %v755 = vpop.xlane.xlu0 %754
        %v756 = vsub.f32 %v748, %v752
        %v757 = vsub.f32 %v749, %v755
        %v758 = vmul.f32 %v756, 1.442695
        %v759 = vpow.pop %v758
        %v760 = vmul.f32 %v757, 1.442695
        %v761 = vpow.pop %v760
        %v762 = vsel %vm533, %v759, 0.0
        %763 = vadd.xlane.f32.xlu0 %v762
        %v764 = vpop.xlane.xlu0 %763
        %v765 = vsel %vm533, %v761, 0.0
        %766 = vadd.xlane.f32.xlu0 %v765
        %v767 = vpop.xlane.xlu0 %766
        %v768 = vrcp.pop %v764
        %v769 = vrcp.pop %v767
        %v770 = vmul.f32 %v759, %v768
        %v771 = vmul.f32 %v761, %v769
        %v772 = vpack.c.bf16 %v771, %v770
        %773 = vrot.lane.b32.xlu0 %v564, 32
        %v774 = vpop.permute.xlu0 %773
        %v777 = vsel %vm533, %v772, 0
        %779 = vmatpush.bf16.msra.mxu0 0
        %780 = vmatpush.bf16.msra.mxu0 0
        %781 = vmatpush.bf16.msra.mxu0 0
        %782 = vmatpush.bf16.msra.mxu0 0
        %783 = vmatpush.bf16.msra.mxu0 0
        %784 = vmatpush.bf16.msra.mxu0 0
        %785 = vmatpush.bf16.msra.mxu0 0
        %786 = vmatpush.bf16.msra.mxu0 %v774
        %787 = vmatmul.bf16.gmra.mxu0 %v777
        %v788 = vpop.f32.mrf.mxu0
        %v789 = vadd.f32 %v558, %v788
        %v790 = vpop.f32.mrf.mxu0
        %v791 = vadd.f32 %v558, %v790
        %792 = vdwg.mxu0
        %795 = vrot.lane.b32.xlu0 %v789, 96
        %v796 = vpop.permute.xlu0 %795
        %797 = vrot.lane.b32.xlu0 %v791, 96
        %v798 = vpop.permute.xlu0 %797
        %vm801 = vcmask 1048320
        %802 = vst.msk [vmem:[%s301] sm:$0xff] %vm801, %v796
        %803 = vst.msk [vmem:[%s301 + $0x8] sm:$0xff] %vm801, %v798
        %s804 = sand.u32 %s191, 1
        %s805 = scalar_lea.sflag [#allocation3], %s804
        %s806 = sand.u32 %s191, 1
        %s807 = smul.addr %s806, 16
        %s808 = scalar_lea.vmem [#allocation2], %s807
        // Predicated region
        $region49: #{tpu_custom_call.1} parent=47 // pred_check
          %p809 = pneg %p201
        $region50: #{tpu_custom_call.1} parent=47 // pred_check_branch
          %811 = sbr.rel (%p809) target = $region52
        $region51: #{tpu_custom_call.1} parent=47 // pred_region
          %813 = vsyncadd %s805, 0
          %s814 = smul.addr %s21, 2
          %s815 = smul.addr %s814, 8
          %s816 = scalar_lea.hbm %s7, %s815
          %s817 = sshll.u32 %s808, 4
          %s818 = int_to_ptr.vmem [resolvable:$true] %s817
          %s819 = sshll.u32 %s816, 4
          %s820 = int_to_ptr.hbm [resolvable:$true] %s819
          %825 = dma.vmem_to_hbm [thread:$0]  %s818, 256, %s820, %s805, 128, 128, 8
        $region52: #{tpu_custom_call.1} parent=47 // pred_fallthru
          _
      $region48: #{tpu_custom_call.1} parent=5 // pred_fallthru
        _
      %p826 = scmp.le.s32.totalorder 2, %s16
      // Predicated region
      $region53: #{tpu_custom_call.1} parent=5 // pred_check
        %p827 = pneg %p826
      $region54: #{tpu_custom_call.1} parent=5 // pred_check_branch
        %829 = sbr.rel (%p827) target = $region56
      $region55: #{tpu_custom_call.1} parent=5 // pred_region
        %s830 = ssub.s32 %s16, 2
        // Predicated region
        $region57: #{tpu_custom_call.1} parent=55 // pred_check
          %p831 = pneg %p207
        $region58: #{tpu_custom_call.1} parent=55 // pred_check_branch
          %833 = sbr.rel (%p831) target = $region60
        $region59: #{tpu_custom_call.1} parent=55 // pred_region
          %s834 = sand.u32 %s192, 1
          %s835 = scalar_lea.sflag [#allocation3], %s834
          %s836 = sand.u32 %s192, 1
          %s837 = smul.addr %s836, 16
          %s838 = scalar_lea.vmem [#allocation2], %s837
          %840 = dma.done %s835, 256
        $region60: #{tpu_custom_call.1} parent=55 // pred_fallthru
          _
      $region56: #{tpu_custom_call.1} parent=5 // pred_fallthru
        _
    $region6: #{tpu_custom_call.1} parent=1 // loop_footer
      %s20 = sadd.s32 1, %s16
    $region7: #{tpu_custom_call.1} parent=1 // loop_footer_branch
      %15 = sbr.rel target = $region3
    $region8: #{tpu_custom_call.1} parent=1 // loop_exit
      _
    %841 = vsyncpa [#allocation3], 1
    %s842 = scalar_lea.sflag [#allocation3], 1
    %843 = vsyncpa %s842, 1

</llo_original>
